<compile_context>
chip_gen: v5e
topology: v5e:2x2
jax: 0.10.0
libtpu: 0.0.40
codegen_flags: <defaults>
</compile_context>

<pallas_src>
import functools
import math

import jax
import jax.numpy as jnp
from jax import lax
from jax.experimental import pallas as pl
from jax.experimental.pallas import tpu as pltpu


def _nll_loss_kernel(pred_ref, target_ref, out_ref, acc_ref, *, total_rows):
    """Accumulates sum_i pred[i, target[i]] over B-tiles; finalizes -sum/B."""
    i = pl.program_id(0)

    @pl.when(i == 0)
    def _init():
        acc_ref[...] = jnp.zeros_like(acc_ref)

    pred = pred_ref[...]                                        # (TB, C) f32
    tgt = target_ref[...]                                       # (TB, 1) i32
    tb, c = pred.shape

    class_ids = lax.broadcasted_iota(jnp.int32, (tb, c), 1)
    row_ids = lax.broadcasted_iota(jnp.int32, (tb, c), 0) + i * tb
    # Use a select (jnp.where), not a multiplicative mask, so garbage
    # (possibly NaN) in the out-of-bounds rows of a partial last tile cannot
    # poison the accumulator.
    hit = (class_ids == tgt) & (row_ids < total_rows)
    contrib = jnp.where(hit, pred, 0.0)                         # (TB, C)
    picked = jnp.sum(contrib, axis=1, keepdims=True)            # (TB, 1)
    acc_ref[...] += jnp.sum(picked, axis=0, keepdims=True)      # (1, 1)

    @pl.when(i == pl.num_programs(0) - 1)
    def _finalize():
        out_ref[...] = -acc_ref[...] / total_rows               # mean + negate


def get_loss_forward(pred, target, trans_feat=None, weight=None, bias=None,
                     *, epoch, warmup_steps, block_b=256):
    """Mirrors get_loss.forward(pred, target, trans_feat).

    pred:       (B, C) float32 log-probabilities
    target:     (B,)   int     class ids
    trans_feat: (B, F) float32   -- unused by the forward *value*: the
    weight:     (F, 1) float32      AttentionWeights softmax over dim=1 of a
    bias:       (1, 1) float32      (B, 1) tensor is identically 1.0, so
                                    weighted_pred == pred exactly.
    """
    # AttentionWeights contributes nothing to the forward value (attn ≡ 1);
    # kept in the signature for fidelity with the PyTorch module.
    del trans_feat, weight, bias

    B, C = pred.shape
    tb = B if B <= block_b else block_b          # full-dim block or 8-multiple
    grid = (pl.cdiv(B, tb),)
    target2d = target.astype(jnp.int32).reshape(B, 1)

    nll = pl.pallas_call(
        functools.partial(_nll_loss_kernel, total_rows=B),
        out_shape=jax.ShapeDtypeStruct((1, 1), jnp.float32),
        grid_spec=pltpu.PrefetchScalarGridSpec(
            num_scalar_prefetch=0,
            grid=grid,
            in_specs=[
                pl.BlockSpec((tb, C), lambda i: (i, 0)),   # pred   (C on lanes)
                pl.BlockSpec((tb, 1), lambda i: (i, 0)),   # target (B, 1) i32
            ],
            out_specs=pl.BlockSpec((1, 1), lambda i: (0, 0)),  # resident accum
            scratch_shapes=[pltpu.VMEM((1, 1), jnp.float32)],
        ),
        compiler_params=pltpu.CompilerParams(
            dimension_semantics=("arbitrary",)),   # reduction over B tiles
    )(pred, target2d)

    # --- DynamicLossFactor (host-side; scalar multiply is free in XLA) ---
    # TODO(synk): original forward sets `epoch = ...` (Ellipsis), which cannot
    # run; epoch is taken as a wrapper argument instead (semantics preserved).
    if epoch < warmup_steps:
        factor = math.pow(epoch / warmup_steps, 0.5)
    else:
        factor = 1.0
    return nll[0, 0] * factor


def _reference(pred, target, trans_feat, weight, bias, epoch, warmup_steps):
    """Pure-JAX reference with the full (mathematically dead) attention path."""
    logits = trans_feat @ weight + bias
    attn = jax.nn.softmax(logits, axis=1)        # (B, 1): softmax over size-1 dim
    weighted = pred * attn
    B = pred.shape[0]
    nll = -jnp.mean(weighted[jnp.arange(B), target])
    factor = math.pow(epoch / warmup_steps, 0.5) if epoch < warmup_steps else 1.0
    return nll * factor


if __name__ == "__main__":
    WARMUP_STEPS = 10
    EPOCH = 5

    key = jax.random.PRNGKey(0)
    # (B, C, F): small case matching the module, plus a tiled case that
    # exercises the multi-block grid and the partial-tile row mask.
    for (B, C, F) in [(8, 16, 32), (300, 16, 32)]:
        k_pred, k_tgt, k_tf, k_w, k_b, key = jax.random.split(key, 6)

        pred = jax.nn.log_softmax(
            jax.random.normal(k_pred, (B, C), dtype=jnp.float32), axis=-1)
        target = jax.random.randint(k_tgt, (B,), 0, C, dtype=jnp.int32)
        trans_feat = jax.random.normal(k_tf, (B, F), dtype=jnp.float32)

        bound = 1.0 / math.sqrt(F)
        weight = jax.random.uniform(k_w, (F, 1), jnp.float32, -bound, bound)
        bias = jax.random.uniform(k_b, (1, 1), jnp.float32, -bound, bound)

        loss = get_loss_forward(pred, target, trans_feat, weight, bias,
                                epoch=EPOCH, warmup_steps=WARMUP_STEPS)
        loss = jax.block_until_ready(loss)

        ref = _reference(pred, target, trans_feat, weight, bias,
                         EPOCH, WARMUP_STEPS)
        assert jnp.allclose(loss, ref, atol=1e-5, rtol=1e-5), (B, loss, ref)

    print("KERNEL_OK")
</pallas_src>

<mosaic_0001>
module attributes {stable_mosaic.version = 11 : i64} {
  func.func @_nll_loss_kernel(%arg0: i32, %arg1: memref<8x16xf32, #tpu.memory_space<vmem>>, %arg2: memref<8x1xi32, #tpu.memory_space<vmem>>, %arg3: memref<1x1xf32, #tpu.memory_space<vmem>>, %arg4: memref<1x1xf32, #tpu.memory_space<vmem>>) attributes {dimension_semantics = [#tpu.dimension_semantics<arbitrary>], iteration_bounds = array<i64: 1>, scalar_prefetch = 0 : i64, scratch_operands = 1 : i64, tpu.core_type = #tpu.core_type<tc>, window_params = [{transform_indices = @transform_0, window_bounds = array<i64: 8, 16>}, {transform_indices = @transform_1, window_bounds = array<i64: 8, 1>}, {pipeline_mode = #tpu.pipeline_mode<synchronous>, transform_indices = @transform_2, window_bounds = array<i64: 1, 1>}]} {
    %c0_i32 = arith.constant 0 : i32
    %0 = arith.cmpi eq, %arg0, %c0_i32 : i32
    %1 = arith.extui %0 : i1 to i32
    %c0_i32_0 = arith.constant 0 : i32
    %2 = arith.cmpi ne, %1, %c0_i32_0 : i32
    scf.if %2 {
      %cst_13 = arith.constant 0.000000e+00 : f32
      %27 = vector.broadcast %cst_13 : f32 to vector<1x1xf32>
      %c0_14 = arith.constant 0 : index
      %c0_15 = arith.constant 0 : index
      %28 = vector.load %arg4[%c0_14, %c0_15] : memref<1x1xf32, #tpu.memory_space<vmem>>, vector<1x1xf32>
      tpu.vector_store %arg4[%c0_14, %c0_15], %27 {strides = array<i32>} : memref<1x1xf32, #tpu.memory_space<vmem>>, vector<1x1xf32>,
    } else {
    }
    %c0 = arith.constant 0 : index
    %c0_1 = arith.constant 0 : index
    %3 = vector.load %arg1[%c0, %c0_1] : memref<8x16xf32, #tpu.memory_space<vmem>>, vector<8x16xf32>
    %c0_2 = arith.constant 0 : index
    %c0_3 = arith.constant 0 : index
    %4 = vector.load %arg2[%c0_2, %c0_3] : memref<8x1xi32, #tpu.memory_space<vmem>>, vector<8x1xi32>
    %5 = tpu.iota {dimensions = array<i32: 1>} : vector<8x16xi32>
    %6 = tpu.iota {dimensions = array<i32: 0>} : vector<8x16xi32>
    %c8_i32 = arith.constant 8 : i32
    %7 = arith.muli %arg0, %c8_i32 : i32
    %8 = vector.broadcast %7 : i32 to vector<8x16xi32>
    %9 = arith.addi %6, %8 : vector<8x16xi32>
    %10 = vector.broadcast %4 : vector<8x1xi32> to vector<8x16xi32>
    %11 = arith.cmpi eq, %5, %10 : vector<8x16xi32>
    %c8_i32_4 = arith.constant 8 : i32
    %12 = vector.broadcast %c8_i32_4 : i32 to vector<8x16xi32>
    %13 = arith.cmpi slt, %9, %12 : vector<8x16xi32>
    %14 = arith.andi %11, %13 : vector<8x16xi1>
    %cst = arith.constant 0.000000e+00 : f32
    %15 = vector.broadcast %cst : f32 to vector<8x16xf32>
    %16 = arith.select %14, %3, %15 : vector<8x16xi1>, vector<8x16xf32>
    %cst_5 = arith.constant dense<0.000000e+00> : vector<8xf32>
    %17 = vector.multi_reduction <add>, %16, %cst_5 [1] : vector<8x16xf32> to vector<8xf32>
    %18 = vector.shape_cast %17 : vector<8xf32> to vector<8x1xf32>
    %c0_6 = arith.constant 0 : index
    %c0_7 = arith.constant 0 : index
    %19 = vector.load %arg4[%c0_6, %c0_7] : memref<1x1xf32, #tpu.memory_space<vmem>>, vector<1x1xf32>
    %cst_8 = arith.constant dense<0.000000e+00> : vector<1xf32>
    %20 = vector.multi_reduction <add>, %18, %cst_8 [0] : vector<8x1xf32> to vector<1xf32>
    %21 = vector.shape_cast %20 : vector<1xf32> to vector<1x1xf32>
    %22 = arith.addf %19, %21 : vector<1x1xf32>
    %c0_9 = arith.constant 0 : index
    %c0_10 = arith.constant 0 : index
    %23 = vector.load %arg4[%c0_9, %c0_10] : memref<1x1xf32, #tpu.memory_space<vmem>>, vector<1x1xf32>
    tpu.vector_store %arg4[%c0_9, %c0_10], %22 {strides = array<i32>} : memref<1x1xf32, #tpu.memory_space<vmem>>, vector<1x1xf32>,
    %c0_i32_11 = arith.constant 0 : i32
    %24 = arith.cmpi eq, %arg0, %c0_i32_11 : i32
    %25 = arith.extui %24 : i1 to i32
    %c0_i32_12 = arith.constant 0 : i32
    %26 = arith.cmpi ne, %25, %c0_i32_12 : i32
    scf.if %26 {
      %c0_13 = arith.constant 0 : index
      %c0_14 = arith.constant 0 : index
      %27 = vector.load %arg4[%c0_13, %c0_14] : memref<1x1xf32, #tpu.memory_space<vmem>>, vector<1x1xf32>
      %cst_15 = arith.constant 0.000000e+00 : f32
      %28 = vector.broadcast %cst_15 : f32 to vector<1x1xf32>
      %29 = arith.subf %28, %27 : vector<1x1xf32>
      %cst_16 = arith.constant 8.000000e+00 : f32
      %30 = vector.broadcast %cst_16 : f32 to vector<1x1xf32>
      %31 = arith.divf %29, %30 : vector<1x1xf32>
      %c0_17 = arith.constant 0 : index
      %c0_18 = arith.constant 0 : index
      %32 = vector.load %arg3[%c0_17, %c0_18] : memref<1x1xf32, #tpu.memory_space<vmem>>, vector<1x1xf32>
      tpu.vector_store %arg3[%c0_17, %c0_18], %31 {strides = array<i32>} : memref<1x1xf32, #tpu.memory_space<vmem>>, vector<1x1xf32>,
    } else {
    }
    return
  }
  func.func @transform_0(%arg0: i32) -> (i32, i32) {
    %c0_i32 = arith.constant 0 : i32
    %c0_i32_0 = arith.constant 0 : i32
    return %arg0, %c0_i32 : i32, i32
  }
  func.func @transform_1(%arg0: i32) -> (i32, i32) {
    %c0_i32 = arith.constant 0 : i32
    %c0_i32_0 = arith.constant 0 : i32
    return %arg0, %c0_i32 : i32, i32
  }
  func.func @transform_2(%arg0: i32) -> (i32, i32) {
    %c0_i32 = arith.constant 0 : i32
    %c0_i32_0 = arith.constant 0 : i32
    %c0_i32_1 = arith.constant 0 : i32
    return %c0_i32, %c0_i32_0 : i32, i32
  }
}

</mosaic_0001>

<llo_original>
// kernel: tpu_custom_call.1
$region0: #{tpu_custom_call.1}
  #allocation0 [shape = 'u32[]', space=smem, size = 0x4, offset = 0x4, fixed_abs, tag = 'smem constant byte address 0x4 - core index']
  #allocation1 [shape = 'u32[72,128]{1,0:T(1,128)}', space=vmem, size = 0x9000, scoped, tag = 'internal scratch']
  #allocation2 [shape = 'f32[1,1]{1,0:T(1,128)}', space=vmem, size = 0x200, scoped, tag = 'scratch operand']
  %s0 = inlined_call_operand.vmem [shape: f32[8,16], index: 0, kind: input, shape index: {}]
  %s1 = inlined_call_operand.vmem [shape: s32[8,1], index: 1, kind: input, shape index: {}]
  %s2 = inlined_call_operand.hbm [shape: f32[1,1], index: 2, kind: output, shape index: {}]
  %s3 = sld [smem:[#allocation0]]
  $region26: #{tpu_custom_call.1} parent=0
    _
  %s5 = ssub.s32 1, %s3
  %s6 = scalar_select 0, %s5, %s3
  $region1: #{tpu_custom_call.1} parent=0
    #allocation3 [shape = 'u8[512]{0}', space=vmem, size = 0x400, scoped, tag = 'output window, operand 0, single buffered']
    #allocation4 [shape = 's32[1]{0}', space=sflag, size = 0x4, scoped, tag = 'scoped memory for tpu_custom_call.1']
    %7 = vsyncpa [#allocation4], 0
    // Predicated region
    $region2: #{tpu_custom_call.1} parent=1 // pred_check
      _
    $region3: #{tpu_custom_call.1} parent=1 // pred_check_branch
      %9 = sbr.rel (0) target = $region5
    $region4: #{tpu_custom_call.1} parent=1 // pred_region
      _
    $region5: #{tpu_custom_call.1} parent=1 // pred_fallthru
      _
    // Predicated region
    $region6: #{tpu_custom_call.1} parent=1 // pred_check
      _
    $region7: #{tpu_custom_call.1} parent=1 // pred_check_branch
      %11 = sbr.rel (0) target = $region9
    $region8: #{tpu_custom_call.1} parent=1 // pred_region
      _
    $region9: #{tpu_custom_call.1} parent=1 // pred_fallthru
      _
    %p12 = scmp.eq.s32.totalorder 0, 0
    // Predicated region
    $region10: #{tpu_custom_call.1} parent=1 // pred_check
      %p13 = pneg %p12
    $region11: #{tpu_custom_call.1} parent=1 // pred_check_branch
      %15 = sbr.rel (%p13) target = $region13
    $region12: #{tpu_custom_call.1} parent=1 // pred_region
      %vm16 = vcmask 0
      %17 = vst.msk [vmem:[#allocation2] sm:$0x1] %vm16, 0.0
    $region13: #{tpu_custom_call.1} parent=1 // pred_fallthru
      _
    %v18 = vld [vmem:[%s0] sm:$0xff]
    %v19 = vld [vmem:[%s1] sm:$0xff]
    %v20 = vlaneseq
    %v21 = vand.u32 %v20, 127
    %v22 = vlaneseq
    %v23 = vshrl.u32 %v22, 7
    %s24 = smul.u32 0, 8
    %v25 = vstv %s24
    %v26 = vadd.s32 %v23, %v25
    %27 = vset.pattern.permute.xlu0 0
    %28 = vperm.xlu0 %27, %v19
    %v29 = vpop.permute.xlu0 %28
    %vm30 = vcmp.eq.s32.totalorder %v21, %v29
    %vm31 = vcmp.lt.s32.totalorder %v26, 8
    %vm32 = vmand %vm30, %vm31
    %v33 = vsel %vm32, %v18, 0.0
    %vm34 = vcmask 130048
    %v35 = vsel %vm34, %v33, 0.0
    %36 = vadd.xlane.f32.xlu0 %v35
    %v37 = vpop.xlane.xlu0 %36
    %v38 = vld [vmem:[#allocation2] sm:$0x1]
    %v39 = vrot.slane %v37, 4
    %v40 = vadd.f32 %v37, %v39
    %v41 = vrot.slane %v40, 2
    %v42 = vadd.f32 %v40, %v41
    %v43 = vrot.slane %v42, 1
    %v44 = vadd.f32 %v42, %v43
    %v45 = vadd.f32 %v38, %v44
    %vm46 = vcmask 0
    %47 = vst.msk [vmem:[#allocation2] sm:$0x1] %vm46, %v45
    // Predicated region
    $region14: #{tpu_custom_call.1} parent=1 // pred_check
      %p48 = pneg %p12
    $region15: #{tpu_custom_call.1} parent=1 // pred_check_branch
      %50 = sbr.rel (%p48) target = $region17
    $region16: #{tpu_custom_call.1} parent=1 // pred_region
      %v51 = vld [vmem:[#allocation2] sm:$0x1]
      %v52 = vsub.f32 0.0, %v51
      %v53 = vrcp.pop 8.0
      %v54 = vmul.f32 8.0, %v53
      %v55 = vsub.f32 1.0, %v54
      %v56 = vmul.f32 %v53, %v55
      %v57 = vadd.f32 %v53, %v56
      %vm58 = vweird.f32 %v53
      %v59 = vsel %vm58, %v53, %v57
      %v60 = vmul.f32 %v52, %v59
      %61 = vst.msk [vmem:[#allocation3] sm:$0x1] %vm46, %v60
    $region17: #{tpu_custom_call.1} parent=1 // pred_fallthru
      _
    // Predicated region
    $region18: #{tpu_custom_call.1} parent=1 // pred_check
      _
    $region19: #{tpu_custom_call.1} parent=1 // pred_check_branch
      %63 = sbr.rel (0) target = $region21
    $region20: #{tpu_custom_call.1} parent=1 // pred_region
      %65 = vsyncadd [#allocation4], 0
      %s67 = sshll.u32 [#allocation3], 4
      %s68 = int_to_ptr.vmem [resolvable:$true] %s67
      %s69 = sshll.u32 %s2, 4
      %s70 = int_to_ptr.hbm [resolvable:$true] %s69
      %72 = dma.vmem_to_hbm [thread:$0]  %s68, 16, %s70, [#allocation4]
    $region21: #{tpu_custom_call.1} parent=1 // pred_fallthru
      _
    // Predicated region
    $region22: #{tpu_custom_call.1} parent=1 // pred_check
      _
    $region23: #{tpu_custom_call.1} parent=1 // pred_check_branch
      %74 = sbr.rel (0) target = $region25
    $region24: #{tpu_custom_call.1} parent=1 // pred_region
      %76 = dma.done [#allocation4], 16
    $region25: #{tpu_custom_call.1} parent=1 // pred_fallthru
      _
    %77 = vsyncpa [#allocation4], 1

</llo_original>
